<compile_context>
chip_gen: v5e
topology: v5e:2x2
jax: 0.10.0
libtpu: 0.0.40
codegen_flags: <defaults>
</compile_context>

<pallas_src>
import jax
import jax.numpy as jnp
from jax.experimental import pallas as pl
from jax.experimental.pallas import tpu as pltpu


def _round_up(x: int, m: int) -> int:
    return ((x + m - 1) // m) * m


def _sublane_multiple(dtype) -> int:
    # Sub-32-bit dtypes pack along sublanes: f32 tiles are (8,128), bf16 (16,128).
    return 8 * (4 // jnp.dtype(dtype).itemsize)


def _tile_bytes(rows: int, cols: int, dtype) -> int:
    d = jnp.dtype(dtype)
    return _round_up(max(rows, 1), _sublane_multiple(d)) * _round_up(max(cols, 1), 128) * d.itemsize


def mlp_encoder_kernel(x_ref, w_ref, b_ref, o_ref):
    # (tm, F) @ (F, H) on the MXU with f32 accumulation, + f32 bias broadcast (1, H).
    z = jnp.dot(x_ref[...], w_ref[...], preferred_element_type=jnp.float32)
    o_ref[...] = (z + b_ref[...]).astype(o_ref.dtype)


def mlp_encoder(x, weight, bias, *, tm=1024, compute_dtype=jnp.bfloat16, out_dtype=None):
    """MLP_encoder.forward:  x @ W + b.

    x:      (N, F) node features
    weight: (F, H) torch Linear weight, pre-transposed
    bias:   (H,) or (1, H)
    returns (N, H) in `out_dtype` (defaults to `compute_dtype`)
    """
    N, F = x.shape
    Fw, H = weight.shape
    assert Fw == F, "weight must be (num_features, hidden)"

    compute_dtype = jnp.dtype(compute_dtype)
    out_dtype = compute_dtype if out_dtype is None else jnp.dtype(out_dtype)

    # Streams in compute_dtype (bf16 by default); bias stays f32 (negligible bytes,
    # exact add into the f32 accumulator).
    if x.dtype != compute_dtype:
        x = x.astype(compute_dtype)
    if weight.dtype != compute_dtype:
        weight = weight.astype(compute_dtype)
    bias = bias.reshape(1, H).astype(jnp.float32)

    # ---- row tile sizing -------------------------------------------------
    tm = max(8, min(_round_up(int(tm), 8), _round_up(N, 8)))

    # v7x has 2 TensorCores: make sure the ("parallel",) row axis has >= 2 steps
    # to shard whenever N allows (no effect on v5e/v6e).
    if N > 8 and pl.cdiv(N, tm) < 2:
        tm = max(8, _round_up(-(-N // 2), 8))

    # ---- VMEM budget (padded tile dims, double-buffered) ------------------
    try:
        phys = pltpu.get_tpu_info().vmem_capacity_bytes
        budget = min(phys - 12 * 1024 * 1024, 100 * 1024 * 1024)
    except Exception:
        budget = 48 * 1024 * 1024          # safe on v7x's 64 MiB physical VMEM
    budget = max(budget, 16 * 1024 * 1024)

    def vmem_estimate(tile_m: int) -> int:
        per_step = _tile_bytes(tile_m, F, compute_dtype) + _tile_bytes(tile_m, H, out_dtype)
        resident = _tile_bytes(F, H, compute_dtype) + _tile_bytes(1, H, jnp.float32)
        return 2 * per_step + 2 * resident   # x/out double-buffered; weight/bias conservative

    while tm > 8 and vmem_estimate(tm) > budget:
        tm = max(8, _round_up(tm // 2, 8))

    est = vmem_estimate(tm)
    vmem_limit = int(min(max(2 * est, 32 * 1024 * 1024), budget))

    grid = (pl.cdiv(N, tm),)

    out = pl.pallas_call(
        mlp_encoder_kernel,
        out_shape=jax.ShapeDtypeStruct((N, H), out_dtype),
        grid_spec=pltpu.PrefetchScalarGridSpec(
            num_scalar_prefetch=0,
            grid=grid,
            in_specs=[
                pl.BlockSpec((tm, F), lambda i: (i, 0)),   # row tile of x (ragged tail OK)
                pl.BlockSpec((F, H), lambda i: (0, 0)),    # full weight, resident in VMEM
                pl.BlockSpec((1, H), lambda i: (0, 0)),    # f32 bias row, resident
            ],
            out_specs=pl.BlockSpec((tm, H), lambda i: (i, 0)),
        ),
        compiler_params=pltpu.CompilerParams(
            dimension_semantics=("parallel",),   # rows shard across v7x's 2 TCs
            vmem_limit_bytes=vmem_limit,
        ),
    )(x, weight, bias)

    return out


if __name__ == "__main__":
    # Small shapes consistent with the module: N nodes, args.num_features, args.hidden.
    # N deliberately NOT a multiple of 8 to exercise the ragged last block.
    num_features, hidden = 13, 32

    key = jax.random.PRNGKey(0)
    k_x, k_w, k_b, k_x2 = jax.random.split(key, 4)

    # torch.nn.Linear default init: U(-1/sqrt(fan_in), 1/sqrt(fan_in)).
    bound = 1.0 / jnp.sqrt(jnp.float32(num_features))
    weight = jax.random.uniform(k_w, (num_features, hidden), dtype=jnp.float32,
                                minval=-bound, maxval=bound)
    bias = jax.random.uniform(k_b, (1, hidden), dtype=jnp.float32,
                              minval=-bound, maxval=bound)

    # --- test 1: tiny graph (N=20), 2-step grid with ragged tail ---------------
    N = 20
    x = jax.random.normal(k_x, (N, num_features), dtype=jnp.float32)
    ref = x @ weight + bias

    out_bf16 = jax.block_until_ready(mlp_encoder(x, weight, bias))            # bf16 streams
    assert out_bf16.shape == (N, hidden) and out_bf16.dtype == jnp.bfloat16
    assert jnp.allclose(out_bf16.astype(jnp.float32), ref, atol=5e-2, rtol=5e-2)

    out_f32 = jax.block_until_ready(
        mlp_encoder(x, weight, bias, compute_dtype=jnp.float32))              # exact path
    assert out_f32.shape == (N, hidden) and out_f32.dtype == jnp.float32
    assert jnp.allclose(out_f32, ref, atol=1e-5, rtol=1e-5)

    # --- test 2: larger N (multi-step grid, default tm=1024, ragged tail) ------
    N2 = 2050
    x2 = jax.random.normal(k_x2, (N2, num_features), dtype=jnp.float32)
    ref2 = x2 @ weight + bias
    out2 = jax.block_until_ready(mlp_encoder(x2, weight, bias))
    assert out2.shape == (N2, hidden)
    assert jnp.allclose(out2.astype(jnp.float32), ref2, atol=5e-2, rtol=5e-2)

    print("KERNEL_OK")
</pallas_src>

<mosaic_0001>
module attributes {stable_mosaic.version = 11 : i64} {
  func.func @mlp_encoder_kernel(%arg0: i32, %arg1: memref<16x13xbf16, #tpu.memory_space<vmem>>, %arg2: memref<13x32xbf16, #tpu.memory_space<vmem>>, %arg3: memref<1x32xf32, #tpu.memory_space<vmem>>, %arg4: memref<16x32xbf16, #tpu.memory_space<vmem>>) attributes {dimension_semantics = [#tpu.dimension_semantics<parallel>], iteration_bounds = array<i64: 2>, scalar_prefetch = 0 : i64, scratch_operands = 0 : i64, tpu.core_type = #tpu.core_type<tc>, window_params = [{transform_indices = @transform_0, window_bounds = array<i64: 16, 13>}, {pipeline_mode = #tpu.pipeline_mode<synchronous>, transform_indices = @transform_1, window_bounds = array<i64: 13, 32>}, {pipeline_mode = #tpu.pipeline_mode<synchronous>, transform_indices = @transform_2, window_bounds = array<i64: 1, 32>}, {transform_indices = @transform_3, window_bounds = array<i64: 16, 32>}]} {
    %c0 = arith.constant 0 : index
    %c0_0 = arith.constant 0 : index
    %0 = vector.load %arg1[%c0, %c0_0] : memref<16x13xbf16, #tpu.memory_space<vmem>>, vector<16x13xbf16>
    %c0_1 = arith.constant 0 : index
    %c0_2 = arith.constant 0 : index
    %1 = vector.load %arg2[%c0_1, %c0_2] : memref<13x32xbf16, #tpu.memory_space<vmem>>, vector<13x32xbf16>
    %cst = arith.constant dense<0.000000e+00> : vector<16x32xf32>
    %2 = tpu.matmul %0, %1, %cst {dimension_numbers = #tpu.dot_dimension_numbers<[1], [0], [0], [1], [0, 0, 1, 1], [], []>} : vector<16x13xbf16>, vector<13x32xbf16>, vector<16x32xf32> -> vector<16x32xf32>
    %c0_3 = arith.constant 0 : index
    %c0_4 = arith.constant 0 : index
    %3 = vector.load %arg3[%c0_3, %c0_4] : memref<1x32xf32, #tpu.memory_space<vmem>>, vector<1x32xf32>
    %4 = vector.broadcast %3 : vector<1x32xf32> to vector<16x32xf32>
    %5 = arith.addf %2, %4 : vector<16x32xf32>
    %6 = arith.truncf %5 : vector<16x32xf32> to vector<16x32xbf16>
    %c0_5 = arith.constant 0 : index
    %c0_6 = arith.constant 0 : index
    %7 = vector.load %arg4[%c0_5, %c0_6] : memref<16x32xbf16, #tpu.memory_space<vmem>>, vector<16x32xbf16>
    tpu.vector_store %arg4[%c0_5, %c0_6], %6 {strides = array<i32>} : memref<16x32xbf16, #tpu.memory_space<vmem>>, vector<16x32xbf16>,
    return
  }
  func.func @transform_0(%arg0: i32) -> (i32, i32) {
    %c0_i32 = arith.constant 0 : i32
    %c0_i32_0 = arith.constant 0 : i32
    return %arg0, %c0_i32 : i32, i32
  }
  func.func @transform_1(%arg0: i32) -> (i32, i32) {
    %c0_i32 = arith.constant 0 : i32
    %c0_i32_0 = arith.constant 0 : i32
    %c0_i32_1 = arith.constant 0 : i32
    return %c0_i32, %c0_i32_0 : i32, i32
  }
  func.func @transform_2(%arg0: i32) -> (i32, i32) {
    %c0_i32 = arith.constant 0 : i32
    %c0_i32_0 = arith.constant 0 : i32
    %c0_i32_1 = arith.constant 0 : i32
    return %c0_i32, %c0_i32_0 : i32, i32
  }
  func.func @transform_3(%arg0: i32) -> (i32, i32) {
    %c0_i32 = arith.constant 0 : i32
    %c0_i32_0 = arith.constant 0 : i32
    return %arg0, %c0_i32 : i32, i32
  }
}

</mosaic_0001>

<llo_original>
// kernel: tpu_custom_call.1
$region0: #{tpu_custom_call.1}
  #allocation0 [shape = 'u32[]', space=smem, size = 0x4, offset = 0x4, fixed_abs, tag = 'smem constant byte address 0x4 - core index']
  #allocation1 [shape = 'u32[72,128]{1,0:T(1,128)}', space=vmem, size = 0x9000, scoped, tag = 'internal scratch']
  %s0 = inlined_call_operand.vmem [shape: bf16[20,13], index: 0, kind: input, shape index: {}]
  %s1 = inlined_call_operand.vmem [shape: bf16[13,32], index: 1, kind: input, shape index: {}]
  %s2 = inlined_call_operand.vmem [shape: f32[1,32], index: 2, kind: input, shape index: {}]
  %s3 = inlined_call_operand.hbm [shape: bf16[20,32], index: 3, kind: output, shape index: {}]
  %s4 = sld [smem:[#allocation0]]
  $region45: #{tpu_custom_call.1} parent=0
    _
  %s6 = ssub.s32 1, %s4
  %s7 = scalar_select 0, %s6, %s4
  $region1: #{tpu_custom_call.1} parent=0
    #allocation2 [shape = 'u8[8192]{0}', space=vmem, size = 0x2000, scoped, tag = 'output window, operand 0']
    #allocation3 [shape = 's32[2]{0}', space=sflag, size = 0x8, scoped, tag = 'scoped memory for tpu_custom_call.1']
    %8 = vsyncpa [#allocation3], 0
    %s9 = scalar_lea.sflag [#allocation3], 1
    %10 = vsyncpa %s9, 0
    loop: start=0, step=1, limit=4
    $region2: #{tpu_custom_call.1} parent=1 // loop_pre_header
      _
    $region3: #{tpu_custom_call.1} parent=1 // loop_header
      %s12 = sphi 0, %s16
      %p13 = scmp.ge.s32.totalorder %s12, 4
      %s22 = sphi 0, %s24
      %s25 = sphi 0, %s22
      %s26 = sphi 0, %s25
      %s42 = sphi 0, %s26
      %s46 = sphi 0, %s46
      %s48 = sphi 0, %s46
      %s49 = sphi 0, %s48
      %s63 = sphi 0, %s49
      %s67 = sphi 0, %s67
      %s69 = sphi 0, %s67
      %s70 = sphi 0, %s69
      %s84 = sphi 0, %s70
      %s90 = sphi 0, %s92
      %s93 = sphi 0, %s90
      %s94 = sphi 0, %s93
      %s110 = sphi 0, %s94
    $region4: #{tpu_custom_call.1} parent=1 // loop_header_branch
      %15 = sbr.rel (%p13) target = $region8
    $region5: #{tpu_custom_call.1} parent=1 // loop_body
      %s17 = ssub.s32 %s12, 1
      %s18 = ssub.s32 %s12, 2
      %s19 = sadd.s32 %s12, 1
      %s20 = ssub.s32 %s12, %s19
      %p21 = scmp.eq.s32.totalorder %s20, 0
      %s23 = sadd.s32 %s22, 1
      %s24 = scalar_select %p21, %s22, %s23
      %p27 = pneg %p21
      %p28 = scmp.eq.s32.totalorder %s12, 1
      %p29 = por %p27, %p28
      %p30 = scmp.ne.s32.totalorder %s22, %s25
      %p31 = scmp.eq.s32.totalorder %s12, 0
      %p32 = por %p30, %p31
      %p33 = scmp.ne.s32.totalorder %s22, %s25
      %p34 = scmp.eq.s32.totalorder %s17, 1
      %p35 = por %p33, %p34
      %p36 = scmp.ne.s32.totalorder %s25, %s26
      %p37 = scmp.eq.s32.totalorder %s17, 0
      %p38 = por %p36, %p37
      %p39 = scmp.ne.s32.totalorder %s25, %s26
      %p40 = scmp.eq.s32.totalorder %s18, 1
      %p41 = por %p39, %p40
      %p43 = scmp.ne.s32.totalorder %s26, %s42
      %p44 = scmp.eq.s32.totalorder %s18, 0
      %p45 = por %p43, %p44
      %s47 = sadd.s32 %s46, 1
      %p50 = scmp.eq.s32.totalorder %s12, 1
      %p51 = scmp.ne.s32.totalorder %s46, %s48
      %p52 = scmp.eq.s32.totalorder %s12, 0
      %p53 = por %p51, %p52
      %p54 = scmp.ne.s32.totalorder %s46, %s48
      %p55 = scmp.eq.s32.totalorder %s17, 1
      %p56 = por %p54, %p55
      %p57 = scmp.ne.s32.totalorder %s48, %s49
      %p58 = scmp.eq.s32.totalorder %s17, 0
      %p59 = por %p57, %p58
      %p60 = scmp.ne.s32.totalorder %s48, %s49
      %p61 = scmp.eq.s32.totalorder %s18, 1
      %p62 = por %p60, %p61
      %p64 = scmp.ne.s32.totalorder %s49, %s63
      %p65 = scmp.eq.s32.totalorder %s18, 0
      %p66 = por %p64, %p65
      %s68 = sadd.s32 %s67, 1
      %p71 = scmp.eq.s32.totalorder %s12, 1
      %p72 = scmp.ne.s32.totalorder %s67, %s69
      %p73 = scmp.eq.s32.totalorder %s12, 0
      %p74 = por %p72, %p73
      %p75 = scmp.ne.s32.totalorder %s67, %s69
      %p76 = scmp.eq.s32.totalorder %s17, 1
      %p77 = por %p75, %p76
      %p78 = scmp.ne.s32.totalorder %s69, %s70
      %p79 = scmp.eq.s32.totalorder %s17, 0
      %p80 = por %p78, %p79
      %p81 = scmp.ne.s32.totalorder %s69, %s70
      %p82 = scmp.eq.s32.totalorder %s18, 1
      %p83 = por %p81, %p82
      %p85 = scmp.ne.s32.totalorder %s70, %s84
      %p86 = scmp.eq.s32.totalorder %s18, 0
      %p87 = por %p85, %p86
      %s88 = ssub.s32 %s12, %s19
      %p89 = scmp.eq.s32.totalorder %s88, 0
      %s91 = sadd.s32 %s90, 1
      %s92 = scalar_select %p89, %s90, %s91
      %p95 = pneg %p89
      %p96 = scmp.eq.s32.totalorder %s12, 1
      %p97 = por %p95, %p96
      %p98 = scmp.ne.s32.totalorder %s90, %s93
      %p99 = scmp.eq.s32.totalorder %s12, 0
      %p100 = por %p98, %p99
      %p101 = scmp.ne.s32.totalorder %s90, %s93
      %p102 = scmp.eq.s32.totalorder %s17, 1
      %p103 = por %p101, %p102
      %p104 = scmp.ne.s32.totalorder %s93, %s94
      %p105 = scmp.eq.s32.totalorder %s17, 0
      %p106 = por %p104, %p105
      %p107 = scmp.ne.s32.totalorder %s93, %s94
      %p108 = scmp.eq.s32.totalorder %s18, 1
      %p109 = por %p107, %p108
      %p111 = scmp.ne.s32.totalorder %s94, %s110
      %p112 = scmp.eq.s32.totalorder %s18, 0
      %p113 = por %p111, %p112
      %p114 = scmp.le.s32.totalorder 1, %s12
      %p115 = scmp.lt.s32.totalorder %s12, 3
      %p116 = pnand %p114, %p115
      %p117 = pneg %p116
      // Predicated region
      $region9: #{tpu_custom_call.1} parent=5 // pred_check
        _
      $region10: #{tpu_custom_call.1} parent=5 // pred_check_branch
        %119 = sbr.rel (%p116) target = $region12
      $region11: #{tpu_custom_call.1} parent=5 // pred_region
        %s120 = ssub.s32 %s12, 1
        // Predicated region
        $region13: #{tpu_custom_call.1} parent=11 // pred_check
          %p121 = pneg %p59
        $region14: #{tpu_custom_call.1} parent=11 // pred_check_branch
          %123 = sbr.rel (%p121) target = $region16
        $region15: #{tpu_custom_call.1} parent=11 // pred_region
          _
        $region16: #{tpu_custom_call.1} parent=11 // pred_fallthru
          _
        // Predicated region
        $region17: #{tpu_custom_call.1} parent=11 // pred_check
          %p124 = pneg %p80
        $region18: #{tpu_custom_call.1} parent=11 // pred_check_branch
          %126 = sbr.rel (%p124) target = $region20
        $region19: #{tpu_custom_call.1} parent=11 // pred_region
          _
        $region20: #{tpu_custom_call.1} parent=11 // pred_fallthru
          _
      $region12: #{tpu_custom_call.1} parent=5 // pred_fallthru
        _
      %p127 = scmp.lt.s32.totalorder %s12, 2
      // Predicated region
      $region21: #{tpu_custom_call.1} parent=5 // pred_check
        %p128 = pneg %p127
      $region22: #{tpu_custom_call.1} parent=5 // pred_check_branch
        %130 = sbr.rel (%p128) target = $region24
      $region23: #{tpu_custom_call.1} parent=5 // pred_region
        // Predicated region
        $region25: #{tpu_custom_call.1} parent=23 // pred_check
          %p131 = pneg %p32
        $region26: #{tpu_custom_call.1} parent=23 // pred_check_branch
          %133 = sbr.rel (%p131) target = $region28
        $region27: #{tpu_custom_call.1} parent=23 // pred_region
          %s134 = smul.u32 2, %s12
          %s135 = ssub.s32 3, %s134
          %p136 = scmp.lt.s32.totalorder %s135, 2
          %s137 = scalar_select %p136, %s135, 2
          %s138 = smul.u32 4, %s137
          %p139 = scmp.lt.s32.totalorder %s134, 2
          %s140 = scalar_select %p139, %s134, 2
          %s141 = smul.addr %s140, 4
          %s142 = scalar_lea.vmem %s0, %s141
          %s143 = smul.u32 2, %s12
          %s144 = ssub.s32 3, %s143
          %p145 = scmp.lt.s32.totalorder %s144, 2
          %s146 = scalar_select %p145, %s144, 2
          %s147 = smul.u32 4, %s146
        $region28: #{tpu_custom_call.1} parent=23 // pred_fallthru
          _
      $region24: #{tpu_custom_call.1} parent=5 // pred_fallthru
        _
      %p148 = scmp.le.s32.totalorder 1, %s12
      %p149 = scmp.lt.s32.totalorder %s12, 3
      %p150 = pnand %p148, %p149
      %p151 = pneg %p150
      // Predicated region
      $region29: #{tpu_custom_call.1} parent=5 // pred_check
        _
      $region30: #{tpu_custom_call.1} parent=5 // pred_check_branch
        %153 = sbr.rel (%p150) target = $region32
      $region31: #{tpu_custom_call.1} parent=5 // pred_region
        %s154 = ssub.s32 %s12, 1
        %s155 = smul.u32 2, %s17
        %s156 = ssub.s32 3, %s155
        %p157 = scmp.lt.s32.totalorder %s156, 2
        %s158 = scalar_select %p157, %s156, 2
        %s159 = smul.u32 4, %s158
        %p160 = scmp.lt.s32.totalorder %s155, 2
        %s161 = scalar_select %p160, %s155, 2
        %s162 = smul.addr %s161, 4
        %s163 = scalar_lea.vmem %s0, %s162
        %p164 = pneg %p38
        %p165 = pneg %p35
        %p166 = pneg %p59
        %p167 = pneg %p56
        %p168 = pneg %p80
        %p169 = pneg %p77
        %p170 = pneg %p106
        %p171 = pneg %p103
        %s172 = sand.u32 %s93, 1
        %s173 = scalar_lea.sflag [#allocation3], %s172
        %s174 = sand.u32 %s93, 1
        %s175 = smul.addr %s174, 8
        %s176 = scalar_lea.vmem [#allocation2], %s175
        %s177 = smul.u32 2, %s17
        %s178 = ssub.s32 3, %s177
        %p179 = scmp.lt.s32.totalorder %s178, 2
        %s180 = scalar_select %p179, %s178, 2
        %s181 = smul.u32 4, %s180
        %p182 = scmp.lt.s32.totalorder %s177, 2
        %s183 = scalar_select %p182, %s177, 2
        %s184 = smul.addr %s183, 4
        %s185 = scalar_lea.vmem %s0, %s184
        %s186 = smul.u32 2, %s17
        %s187 = ssub.s32 3, %s186
        %p188 = scmp.lt.s32.totalorder %s187, 2
        %s189 = scalar_select %p188, %s187, 2
        %s190 = smul.u32 4, %s189
        %s191 = smul.u32 2, %s17
        %s192 = ssub.s32 3, %s191
        %p193 = scmp.lt.s32.totalorder %s192, 2
        %s194 = scalar_select %p193, %s192, 2
        %s195 = smul.u32 4, %s194
        %v197 = vld [vmem:[%s185] sm:$0xf]
        %v198 = vld [vmem:[%s185 + $0x4] sm:$0xf]
        %v199 = vld [vmem:[%s1] sm:$0xf]
        %v200 = vld [vmem:[%s1 + $0x4] sm:$0x7]
        %v201 = vld [vmem:[%s2] sm:$0x1]
        %v203 = vperm.slane %v201, 0
        %v207 = vunpack.c.l.b16 %v197
        %v208 = vunpack.c.l.b16 %v198
        %v209 = vpack.c.b16 %v208, %v207
        %v212 = vunpack.c.l.b16 %v199
        %v213 = vunpack.c.l.b16 %v200
        %v214 = vpack.c.b16 %v213, %v212
        %vm215 = vcmask 105472
        %v217 = vsel %vm215, %v209, 0
        %vm219 = vcmask 1045504
        %vm220 = vcmask 1046528
        %v221 = vsel %vm219, 4294967295, 65535
        %v222 = vsel %vm220, %v221, 0
        %v224 = vand.u32 %v214, %v222
        %226 = vmatpush.bf16.msra.mxu0 0
        %227 = vmatpush.bf16.msra.mxu0 0
        %228 = vmatpush.bf16.msra.mxu0 0
        %229 = vmatpush.bf16.msra.mxu0 0
        %230 = vmatpush.bf16.msra.mxu0 0
        %231 = vmatpush.bf16.msra.mxu0 0
        %232 = vmatpush.bf16.msra.mxu0 0
        %233 = vmatpush.bf16.msra.mxu0 %v224
        %234 = vmatmul.bf16.gmra.mxu0 %v217
        %v235 = vpop.f32.mrf.mxu0
        %v236 = vadd.f32 %v203, %v235
        %v237 = vpop.f32.mrf.mxu0
        %v238 = vadd.f32 %v203, %v237
        %239 = vdwg.mxu0
        %v240 = vpack.c.bf16 %v236, %v236
        %v241 = vpack.c.bf16 %v238, %v238
        %vm242 = vcmask 257024
        %243 = vst.msk [vmem:[%s176] sm:$0xf] %vm242, %v240
        %244 = vst.msk [vmem:[%s176 + $0x4] sm:$0xf] %vm242, %v241
        %s245 = sand.u32 %s93, 1
        %s246 = scalar_lea.sflag [#allocation3], %s245
        %s247 = sand.u32 %s93, 1
        %s248 = smul.addr %s247, 8
        %s249 = scalar_lea.vmem [#allocation2], %s248
        // Predicated region
        $region33: #{tpu_custom_call.1} parent=31 // pred_check
          %p250 = pneg %p103
        $region34: #{tpu_custom_call.1} parent=31 // pred_check_branch
          %252 = sbr.rel (%p250) target = $region36
        $region35: #{tpu_custom_call.1} parent=31 // pred_region
          %s253 = smul.u32 2, %s17
          %s254 = ssub.s32 3, %s253
          %p255 = scmp.lt.s32.totalorder %s254, 2
          %s256 = scalar_select %p255, %s254, 2
          %s257 = smul.u32 4, %s256
          %s258 = ssub.s32 8, %s257
          %s259 = sshll.u32 %s258, 4
          %260 = vsyncadd %s246, %s259
          %p261 = scmp.ne.s32.totalorder 0, %s257
          %s262 = smul.addr %s253, 4
          %s263 = scalar_lea.hbm %s3, %s262
          %s264 = smul.u32 4, %s256
          %s265 = sshll.u32 %s249, 4
          %s266 = int_to_ptr.vmem [resolvable:$true] %s265
          %s267 = sshll.u32 %s263, 4
          %s268 = int_to_ptr.hbm [resolvable:$true] %s267
          %s269 = sshll.u32 %s264, 4
          %273 = dma.vmem_to_hbm [thread:$0]  (%p261), %s266, %s269, %s268, %s246, 64, 64, 4
        $region36: #{tpu_custom_call.1} parent=31 // pred_fallthru
          _
      $region32: #{tpu_custom_call.1} parent=5 // pred_fallthru
        _
      %p274 = scmp.le.s32.totalorder 2, %s12
      // Predicated region
      $region37: #{tpu_custom_call.1} parent=5 // pred_check
        %p275 = pneg %p274
      $region38: #{tpu_custom_call.1} parent=5 // pred_check_branch
        %277 = sbr.rel (%p275) target = $region40
      $region39: #{tpu_custom_call.1} parent=5 // pred_region
        %s278 = ssub.s32 %s12, 2
        // Predicated region
        $region41: #{tpu_custom_call.1} parent=39 // pred_check
          %p279 = pneg %p109
        $region42: #{tpu_custom_call.1} parent=39 // pred_check_branch
          %281 = sbr.rel (%p279) target = $region44
        $region43: #{tpu_custom_call.1} parent=39 // pred_region
          %s282 = sand.u32 %s94, 1
          %s283 = scalar_lea.sflag [#allocation3], %s282
          %s284 = sand.u32 %s94, 1
          %s285 = smul.addr %s284, 8
          %s286 = scalar_lea.vmem [#allocation2], %s285
          %288 = dma.done %s283, 128
        $region44: #{tpu_custom_call.1} parent=39 // pred_fallthru
          _
      $region40: #{tpu_custom_call.1} parent=5 // pred_fallthru
        _
    $region6: #{tpu_custom_call.1} parent=1 // loop_footer
      %s16 = sadd.s32 1, %s12
    $region7: #{tpu_custom_call.1} parent=1 // loop_footer_branch
      %11 = sbr.rel target = $region3
    $region8: #{tpu_custom_call.1} parent=1 // loop_exit
      _
    %289 = vsyncpa [#allocation3], 1
    %s290 = scalar_lea.sflag [#allocation3], 1
    %291 = vsyncpa %s290, 1

</llo_original>
